<compile_context>
chip_gen: v7x
topology: tpu7x:2x2x1
jax: 0.10.0
libtpu: 0.0.40
codegen_flags: <defaults>
</compile_context>

<pallas_src>
import functools

import jax
import jax.numpy as jnp
from jax.experimental import pallas as pl
from jax.experimental.pallas import tpu as pltpu

_TARGET_BLOCK_BYTES = 2 * 1024 * 1024  # ~2 MiB per block -> 8 MiB pipeline footprint
_SMALL_BYTES = 512 * 1024              # below this, skip pallas (dispatch dominates)
_SUB = 32                              # sublane multiple safe for any dtype packing


def _cdiv(a: int, b: int) -> int:
    return -(-a // b)


def _round_up(a: int, b: int) -> int:
    return _cdiv(a, b) * b


def _pick_lanes(n: int):
    """Largest lane width (multiple of 128) that divides n -> pad-free reshape."""
    for lanes in (512, 256, 128):
        if n % lanes == 0:
            return lanes
    return None


def _pick_block_rows(total_rows: int, lanes: int, itemsize: int) -> int:
    target = max(_SUB, (_TARGET_BLOCK_BYTES // (lanes * itemsize)) // _SUB * _SUB)
    if total_rows <= _SUB:
        return total_rows  # single full-extent block (allowed by the (8,128) rule)
    if total_rows <= target:
        # Split into (at least) two blocks so v7x's second TensorCore gets work.
        return min(target, _round_up(_cdiv(total_rows, 2), _SUB))
    # Large arrays: ~target-sized blocks with an (best-effort) even block count
    # so the two v7x TensorCores stay load-balanced.
    nb = _cdiv(total_rows, target)
    if nb % 2:
        nb += 1
    return max(_SUB, min(target, _round_up(_cdiv(total_rows, nb), _SUB)))


def _offset_kernel(x_ref, o_ref, *, offset: float):
    # `offset` is a trace-time constant baked in by closure; the weak-typed
    # scalar add keeps the tile dtype (bf16 stays bf16, f32 stays f32).
    o_ref[...] = x_ref[...] + offset


def offset_layer(x, offset: float, *, force_pallas: bool = False, donate_x: bool = False):
    """Pallas implementation of `_OffsetLayer.forward`: x + offset."""
    x = jnp.asarray(x)
    orig_shape = x.shape
    dtype = x.dtype
    n = x.size
    itemsize = jnp.dtype(dtype).itemsize

    # Non-float inputs: match PyTorch's `int tensor + python float` promotion by
    # letting XLA handle it.
    # TODO(synk): no Pallas path for int->float type promotion.
    if not jnp.issubdtype(dtype, jnp.floating):
        return x + offset

    if n == 0 or (not force_pallas and n * itemsize < _SMALL_BYTES):
        # Tiny tensors: fixed pallas_call dispatch dominates; XLA fuses the
        # scalar add into a single HBM pass anyway.
        return x + offset

    lanes = _pick_lanes(n)
    pad = 0
    if lanes is None:
        if not force_pallas:
            # pad + kernel + slice ~= 3 HBM passes vs 1 fused pass -> not worth it.
            return x + offset
        lanes = 512
        pad = _round_up(n, lanes) - n  # pad only to the row boundary (< 512 elems)

    flat = x.reshape(-1)
    if pad:
        flat = jnp.pad(flat, (0, pad))
    total_rows = flat.size // lanes
    x2 = flat.reshape(total_rows, lanes)  # pure bitcast when pad == 0

    block_rows = _pick_block_rows(total_rows, lanes, itemsize)
    num_blocks = _cdiv(total_rows, block_rows)  # ragged last block is masked by Pallas

    kernel = functools.partial(_offset_kernel, offset=float(offset))

    out2 = pl.pallas_call(
        kernel,
        out_shape=jax.ShapeDtypeStruct((total_rows, lanes), dtype),
        grid=(num_blocks,),
        in_specs=[pl.BlockSpec((block_rows, lanes), lambda i: (i, 0))],
        out_specs=pl.BlockSpec((block_rows, lanes), lambda i: (i, 0)),
        compiler_params=pltpu.CompilerParams(
            # Lets v7x shard blocks across its 2 TensorCores; no-op on v5e/v6e.
            dimension_semantics=("parallel",),
        ),
        cost_estimate=pl.CostEstimate(
            flops=n, transcendentals=0, bytes_accessed=2 * n * itemsize
        ),
        input_output_aliases=({0: 0} if donate_x else {}),
    )(x2)

    out = out2.reshape(-1)
    if pad:
        out = out[:n]
    return out.reshape(orig_shape)


if __name__ == "__main__":
    key = jax.random.PRNGKey(0)
    offset = 0.5  # deterministic "parameter" from the module's __init__

    # Module-consistent small shape; force the Pallas path so the kernel runs.
    B, C, H, W = 2, 4, 16, 16
    x = jax.random.normal(key, (B, C, H, W), dtype=jnp.float32)
    out = jax.block_until_ready(offset_layer(x, offset, force_pallas=True))
    ref = x + offset
    assert out.shape == x.shape and out.dtype == x.dtype
    assert jnp.allclose(out, ref, atol=1e-6), "mismatch vs reference (small, forced)"

    # Auto path on the tiny input (takes the fused fast path).
    out_auto = jax.block_until_ready(offset_layer(x, offset))
    assert jnp.allclose(out_auto, ref, atol=1e-6), "mismatch vs reference (small, auto)"

    # Medium shape: exercises the auto Pallas path with 2 blocks (v7x 2-TC split).
    key2, _ = jax.random.split(key)
    x_med = jax.random.normal(key2, (2, 4, 128, 512), dtype=jnp.float32)
    out_med = jax.block_until_ready(offset_layer(x_med, offset))
    ref_med = x_med + offset
    assert out_med.shape == x_med.shape and out_med.dtype == x_med.dtype
    assert jnp.allclose(out_med, ref_med, atol=1e-6), "mismatch vs reference (medium)"

    print("KERNEL_OK")
</pallas_src>

<mosaic_0001>
module attributes {stable_mosaic.version = 11 : i64} {
  func.func @_offset_kernel(%arg0: i32, %arg1: memref<4x512xf32, #tpu.memory_space<vmem>>, %arg2: memref<4x512xf32, #tpu.memory_space<vmem>>) attributes {dimension_semantics = [#tpu.dimension_semantics<parallel>], iteration_bounds = array<i64: 1>, scalar_prefetch = 0 : i64, scratch_operands = 0 : i64, tpu.core_type = #tpu.core_type<tc>, window_params = [{transform_indices = @transform_0, window_bounds = array<i64: 4, 512>}, {transform_indices = @transform_1, window_bounds = array<i64: 4, 512>}]} {
    %c0 = arith.constant 0 : index
    %c0_0 = arith.constant 0 : index
    %0 = vector.load %arg1[%c0, %c0_0] : memref<4x512xf32, #tpu.memory_space<vmem>>, vector<4x512xf32>
    %cst = arith.constant 5.000000e-01 : f32
    %1 = vector.broadcast %cst : f32 to vector<4x512xf32>
    %2 = arith.addf %0, %1 : vector<4x512xf32>
    %c0_1 = arith.constant 0 : index
    %c0_2 = arith.constant 0 : index
    %3 = vector.load %arg2[%c0_1, %c0_2] : memref<4x512xf32, #tpu.memory_space<vmem>>, vector<4x512xf32>
    tpu.vector_store %arg2[%c0_1, %c0_2], %2 {strides = array<i32>} : memref<4x512xf32, #tpu.memory_space<vmem>>, vector<4x512xf32>,
    return
  }
  func.func @transform_0(%arg0: i32) -> (i32, i32) {
    %c0_i32 = arith.constant 0 : i32
    %c0_i32_0 = arith.constant 0 : i32
    return %arg0, %c0_i32 : i32, i32
  }
  func.func @transform_1(%arg0: i32) -> (i32, i32) {
    %c0_i32 = arith.constant 0 : i32
    %c0_i32_0 = arith.constant 0 : i32
    return %arg0, %c0_i32 : i32, i32
  }
}

</mosaic_0001>

<llo_original>
// kernel: tpu_custom_call.1
$region0: #{tpu_custom_call.1}
  #allocation0 [shape = 'u32[]', space=smem, size = 0x4, offset = 0x4, fixed_abs, tag = 'smem constant byte address 0x4 - core index']
  #allocation1 [shape = 'u32[144,128]{1,0:T(1,128)}', space=vmem, size = 0x12000, scoped, tag = 'internal scratch']
  %s0 = inlined_call_operand.hbm [shape: f32[4,512], index: 0, kind: input, shape index: {}]
  %s1 = inlined_call_operand.hbm [shape: f32[4,512], index: 1, kind: output, shape index: {}]
  %s2 = sld [smem:[#allocation0]]
  $region18: #{tpu_custom_call.1} parent=0
    _
  %s4 = ssub.s32 1, %s2
  %s5 = scalar_select 0, %s4, %s2
  $region1: #{tpu_custom_call.1} parent=0
    #allocation2 [shape = 'u8[8192]{0}', space=vmem, size = 0x2000, scoped, tag = 'input window, operand 0, single buffered']
    #allocation3 [shape = 's32[1]{0}', space=sflag, size = 0x4, scoped, tag = 'scoped memory for tpu_custom_call.1']
    #allocation4 [shape = 's32[1]{0}', space=sflag, size = 0x4, scoped, tag = 'scoped memory for tpu_custom_call.1']
    #allocation5 [shape = 'u8[8192]{0}', space=vmem, size = 0x2000, scoped, tag = 'output window, operand 0, single buffered']
    %6 = vsyncpa [#allocation3], 0
    %7 = vsyncpa [#allocation4], 0
    // Predicated region
    $region2: #{tpu_custom_call.1} parent=1 // pred_check
      _
    $region3: #{tpu_custom_call.1} parent=1 // pred_check_branch
      %9 = sbr.rel (0) target = $region5
    $region4: #{tpu_custom_call.1} parent=1 // pred_region
      %s11 = ssub.s32 256, 256
      %12 = vsyncadd [#allocation3], %s11
      %s14 = sshll.u32 [#allocation2], 4
      %s15 = int_to_ptr.vmem [resolvable:$true] %s14
      %17 = dma.hbm_to_vmem [thread:$0]  %s0, 256, %s15, [#allocation3]
    $region5: #{tpu_custom_call.1} parent=1 // pred_fallthru
      _
    // Predicated region
    $region6: #{tpu_custom_call.1} parent=1 // pred_check
      _
    $region7: #{tpu_custom_call.1} parent=1 // pred_check_branch
      %19 = sbr.rel (0) target = $region9
    $region8: #{tpu_custom_call.1} parent=1 // pred_region
      %20 = dma.done [#allocation3], 256
    $region9: #{tpu_custom_call.1} parent=1 // pred_fallthru
      _
    %v21 = vld [vmem:[#allocation2] sm:$0xff]
    %v22 = vld [vmem:[#allocation2 + $0x8] sm:$0xff]
    %v23 = vadd.f32 %v21, 0.5
    %v24 = vadd.f32 %v22, 0.5
    %25 = vst [vmem:[#allocation5] sm:$0xff] %v23
    %26 = vst [vmem:[#allocation5 + $0x8] sm:$0xff] %v24
    // Predicated region
    $region10: #{tpu_custom_call.1} parent=1 // pred_check
      _
    $region11: #{tpu_custom_call.1} parent=1 // pred_check_branch
      %28 = sbr.rel (0) target = $region13
    $region12: #{tpu_custom_call.1} parent=1 // pred_region
      %s30 = ssub.s32 256, 256
      %31 = vsyncadd [#allocation4], %s30
      %s33 = sshll.u32 [#allocation5], 4
      %s34 = int_to_ptr.vmem [resolvable:$true] %s33
      %36 = dma.vmem_to_hbm [thread:$0]  %s34, 256, %s1, [#allocation4]
    $region13: #{tpu_custom_call.1} parent=1 // pred_fallthru
      _
    // Predicated region
    $region14: #{tpu_custom_call.1} parent=1 // pred_check
      _
    $region15: #{tpu_custom_call.1} parent=1 // pred_check_branch
      %38 = sbr.rel (0) target = $region17
    $region16: #{tpu_custom_call.1} parent=1 // pred_region
      %39 = dma.done [#allocation4], 256
    $region17: #{tpu_custom_call.1} parent=1 // pred_fallthru
      _
    %40 = vsyncpa [#allocation3], 1
    %41 = vsyncpa [#allocation4], 1

</llo_original>
